<compile_context>
chip_gen: v6e
topology: v6e:2x2x1
jax: 0.10.0
libtpu: 0.0.40
codegen_flags: <defaults>
</compile_context>

<pallas_src>
import jax
import jax.numpy as jnp
from jax.experimental import pallas as pl
from jax.experimental.pallas import tpu as pltpu

LEAKY_SLOPE = 0.01  # nn.LeakyReLU default negative_slope


def _round_up(x, m):
    return ((x + m - 1) // m) * m


def _vmem_capacity_bytes():
    try:
        return int(pltpu.get_tpu_info().vmem_capacity_bytes)
    except Exception:
        return 64 << 20  # conservative fallback: v7x per-TensorCore VMEM


def encoder_kernel(x_ref, w1_ref, b1_ref, w2_ref, b2_ref, o_ref):
    # Dropout(p=0) is identity.
    # Cast x to the MXU dtype *inside* the kernel (VPU) -> no extra HBM pass.
    x = x_ref[...].astype(w1_ref.dtype)
    # Hidden layer: Linear (MXU, f32 accumulate) + bias + LeakyReLU (f32 VPU).
    h = jnp.dot(x, w1_ref[...], preferred_element_type=jnp.float32)
    h = h + b1_ref[...]
    h = jnp.where(h > 0, h, LEAKY_SLOPE * h)
    # Output layer: Linear. Cast h to the weight dtype so the second matmul stays
    # on the fast (bf16) MXU path when weights are bf16.
    out = jnp.dot(h.astype(w2_ref.dtype), w2_ref[...],
                  preferred_element_type=jnp.float32)
    out = out + b2_ref[...]
    o_ref[...] = out.astype(o_ref.dtype)


def encoder_forward(x, w1, b1, w2, b2, *, tile_b=None, use_bf16=True):
    """x: [B, F]; w1: [F, H]; b1: [1, H]; w2: [H, L]; b2: [1, L] -> [B, L]."""
    B, F = x.shape
    H = w1.shape[1]
    L = w2.shape[1]
    out_dtype = x.dtype
    mxu_dtype = jnp.bfloat16 if use_bf16 else x.dtype

    # Only the hidden dim is padded (weights/biases only — tiny, fetched once).
    # Zero-padded hidden columns stay exactly zero through bias + LeakyReLU and
    # meet zero rows of W2, so the math is exact.
    Hp = _round_up(H, 128)
    w1_p = jnp.pad(w1, ((0, 0), (0, Hp - H))).astype(mxu_dtype)
    w2_p = jnp.pad(w2, ((0, Hp - H), (0, 0))).astype(mxu_dtype)
    b1_p = jnp.pad(b1, ((0, 0), (0, Hp - H))).astype(jnp.float32)
    b2_p = b2.astype(jnp.float32)

    itm_x = jnp.dtype(x.dtype).itemsize
    itm_w = jnp.dtype(mxu_dtype).itemsize
    itm_o = jnp.dtype(out_dtype).itemsize
    w_bytes = (F * Hp + Hp * L) * itm_w + (Hp + L) * 4

    vmem_cap = _vmem_capacity_bytes()
    # Leave headroom below the physical ceiling (Mosaic internal scratch etc.):
    # ~56 MiB on v7x (64 MiB/TC), ~100 MiB on v5e/v6e (128 MiB).
    max_limit = min(vmem_cap - (8 << 20), 100 << 20)

    if tile_b is None:
        # Aim for >= ~8 grid steps when B allows (megacore sharding on v7x plus
        # DMA/compute overlap); allow bigger tiles on 128-MiB-VMEM chips.
        cap = 2048 if vmem_cap >= (96 << 20) else 512
        tile_b = min(cap, max(8, _round_up(pl.cdiv(B, 8), 8)))
    tile_b = max(8, _round_up(tile_b, 8))
    # Bound tile_b by the VMEM budget: double-buffered x/out tiles + resident
    # (conservatively double-buffered) weights + headroom.
    per_row = 2 * (F * itm_x + L * itm_o)
    row_budget = max(max_limit - 2 * w_bytes - (4 << 20), 1 << 20)
    tile_b = max(8, min(tile_b, (row_budget // per_row) // 8 * 8))
    tile_b = min(tile_b, _round_up(B, 8))

    grid = (pl.cdiv(B, tile_b),)

    needed = tile_b * per_row + 2 * w_bytes + (4 << 20)
    vmem_limit = int(min(max(needed, 16 << 20), max_limit))

    cost = pl.CostEstimate(
        flops=2 * B * (F * Hp + Hp * L),
        transcendentals=0,
        bytes_accessed=int(B * F * itm_x + w_bytes + B * L * itm_o),
    )

    # TODO(synk): for very large F where 2*F*Hp*itm_w no longer fits the VMEM
    # budget (mainly v7x), add a K-tiled grid axis over F with an f32 VMEM
    # accumulator and pl.when init/finalize instead of keeping W1 fully resident.

    return pl.pallas_call(
        encoder_kernel,
        out_shape=jax.ShapeDtypeStruct((B, L), out_dtype),
        grid_spec=pltpu.PrefetchScalarGridSpec(
            num_scalar_prefetch=0,
            grid=grid,
            in_specs=[
                # x streamed unpadded / un-cast; full F on the last dim. The ragged
                # last batch tile relies on Pallas clipping out-of-bounds writes.
                pl.BlockSpec((tile_b, F), lambda i: (i, 0)),
                # Constant index maps -> weights/biases stay resident in VMEM and
                # are not re-fetched across grid steps.
                pl.BlockSpec((F, Hp), lambda i: (0, 0)),   # W1
                pl.BlockSpec((1, Hp), lambda i: (0, 0)),   # b1
                pl.BlockSpec((Hp, L), lambda i: (0, 0)),   # W2
                pl.BlockSpec((1, L), lambda i: (0, 0)),    # b2
            ],
            out_specs=pl.BlockSpec((tile_b, L), lambda i: (i, 0)),
        ),
        compiler_params=pltpu.CompilerParams(
            dimension_semantics=("parallel",),
            vmem_limit_bytes=vmem_limit,
        ),
        cost_estimate=cost,
    )(x, w1_p, b1_p, w2_p, b2_p)


def init_params(key, feature_size, hidden, latent_dims, dtype=jnp.float32):
    # Deterministic init mimicking PyTorch Linear: U(-1/sqrt(fan_in), 1/sqrt(fan_in))
    k1, k2, k3, k4 = jax.random.split(key, 4)
    bound1 = 1.0 / jnp.sqrt(feature_size)
    bound2 = 1.0 / jnp.sqrt(hidden)
    w1 = jax.random.uniform(k1, (feature_size, hidden), dtype, -bound1, bound1)
    b1 = jax.random.uniform(k2, (1, hidden), dtype, -bound1, bound1)
    w2 = jax.random.uniform(k3, (hidden, latent_dims), dtype, -bound2, bound2)
    b2 = jax.random.uniform(k4, (1, latent_dims), dtype, -bound2, bound2)
    return w1, b1, w2, b2


def reference_forward(x, w1, b1, w2, b2):
    h = x @ w1 + b1
    h = jnp.where(h > 0, h, LEAKY_SLOPE * h)
    return h @ w2 + b2


if __name__ == "__main__":
    # Small shapes consistent with the module defaults.
    feature_size = 32
    hidden = 128          # default layer_sizes = (128,)
    latent_dims = 16

    key = jax.random.PRNGKey(0)
    kx, kp = jax.random.split(key)
    w1, b1, w2, b2 = init_params(kp, feature_size, hidden, latent_dims)

    # Case 1: batch divisible by the tile.
    batch = 8
    x = jax.random.normal(kx, (batch, feature_size), jnp.float32)
    ref = reference_forward(x, w1, b1, w2, b2)

    out_f32 = jax.block_until_ready(
        encoder_forward(x, w1, b1, w2, b2, use_bf16=False))
    assert out_f32.shape == (batch, latent_dims)
    assert jnp.allclose(out_f32, ref, atol=1e-5, rtol=1e-5), "f32 mismatch vs reference"

    out_bf16 = jax.block_until_ready(
        encoder_forward(x, w1, b1, w2, b2, use_bf16=True))
    assert out_bf16.shape == (batch, latent_dims)
    assert jnp.allclose(out_bf16, ref, atol=5e-2, rtol=5e-2), "bf16 mismatch vs reference"

    # Case 2: ragged batch (exercises the cdiv grid + clipped last tile).
    batch2 = 10
    x2 = jax.random.normal(jax.random.fold_in(kx, 1), (batch2, feature_size),
                           jnp.float32)
    ref2 = reference_forward(x2, w1, b1, w2, b2)
    out2 = jax.block_until_ready(
        encoder_forward(x2, w1, b1, w2, b2, tile_b=8, use_bf16=False))
    assert out2.shape == (batch2, latent_dims)
    assert jnp.allclose(out2, ref2, atol=1e-5, rtol=1e-5), "ragged-batch mismatch"

    print("KERNEL_OK")
</pallas_src>

<mosaic_0001>
module attributes {stable_mosaic.version = 11 : i64} {
  func.func @encoder_kernel(%arg0: i32, %arg1: memref<8x32xf32, #tpu.memory_space<vmem>>, %arg2: memref<32x128xf32, #tpu.memory_space<vmem>>, %arg3: memref<1x128xf32, #tpu.memory_space<vmem>>, %arg4: memref<128x16xf32, #tpu.memory_space<vmem>>, %arg5: memref<1x16xf32, #tpu.memory_space<vmem>>, %arg6: memref<8x16xf32, #tpu.memory_space<vmem>>) attributes {dimension_semantics = [#tpu.dimension_semantics<parallel>], iteration_bounds = array<i64: 1>, scalar_prefetch = 0 : i64, scratch_operands = 0 : i64, tpu.core_type = #tpu.core_type<tc>, window_params = [{transform_indices = @transform_0, window_bounds = array<i64: 8, 32>}, {pipeline_mode = #tpu.pipeline_mode<synchronous>, transform_indices = @transform_1, window_bounds = array<i64: 32, 128>}, {pipeline_mode = #tpu.pipeline_mode<synchronous>, transform_indices = @transform_2, window_bounds = array<i64: 1, 128>}, {pipeline_mode = #tpu.pipeline_mode<synchronous>, transform_indices = @transform_3, window_bounds = array<i64: 128, 16>}, {pipeline_mode = #tpu.pipeline_mode<synchronous>, transform_indices = @transform_4, window_bounds = array<i64: 1, 16>}, {transform_indices = @transform_5, window_bounds = array<i64: 8, 16>}]} {
    %c0 = arith.constant 0 : index
    %c0_0 = arith.constant 0 : index
    %0 = vector.load %arg1[%c0, %c0_0] : memref<8x32xf32, #tpu.memory_space<vmem>>, vector<8x32xf32>
    %c0_1 = arith.constant 0 : index
    %c0_2 = arith.constant 0 : index
    %1 = vector.load %arg2[%c0_1, %c0_2] : memref<32x128xf32, #tpu.memory_space<vmem>>, vector<32x128xf32>
    %cst = arith.constant dense<0.000000e+00> : vector<8x128xf32>
    %2 = tpu.matmul %0, %1, %cst {dimension_numbers = #tpu.dot_dimension_numbers<[1], [0], [0], [1], [0, 0, 1, 1], [], []>} : vector<8x32xf32>, vector<32x128xf32>, vector<8x128xf32> -> vector<8x128xf32>
    %c0_3 = arith.constant 0 : index
    %c0_4 = arith.constant 0 : index
    %3 = vector.load %arg3[%c0_3, %c0_4] : memref<1x128xf32, #tpu.memory_space<vmem>>, vector<1x128xf32>
    %4 = vector.broadcast %3 : vector<1x128xf32> to vector<8x128xf32>
    %5 = arith.addf %2, %4 : vector<8x128xf32>
    %cst_5 = arith.constant 0.000000e+00 : f32
    %6 = vector.broadcast %cst_5 : f32 to vector<8x128xf32>
    %7 = arith.cmpf ogt, %5, %6 : vector<8x128xf32>
    %cst_6 = arith.constant 0.00999999977 : f32
    %8 = vector.broadcast %cst_6 : f32 to vector<8x128xf32>
    %9 = arith.mulf %8, %5 : vector<8x128xf32>
    %10 = arith.select %7, %5, %9 : vector<8x128xi1>, vector<8x128xf32>
    %c0_7 = arith.constant 0 : index
    %c0_8 = arith.constant 0 : index
    %11 = vector.load %arg4[%c0_7, %c0_8] : memref<128x16xf32, #tpu.memory_space<vmem>>, vector<128x16xf32>
    %cst_9 = arith.constant dense<0.000000e+00> : vector<8x16xf32>
    %12 = tpu.matmul %10, %11, %cst_9 {dimension_numbers = #tpu.dot_dimension_numbers<[1], [0], [0], [1], [0, 0, 1, 1], [], []>} : vector<8x128xf32>, vector<128x16xf32>, vector<8x16xf32> -> vector<8x16xf32>
    %c0_10 = arith.constant 0 : index
    %c0_11 = arith.constant 0 : index
    %13 = vector.load %arg5[%c0_10, %c0_11] : memref<1x16xf32, #tpu.memory_space<vmem>>, vector<1x16xf32>
    %14 = vector.broadcast %13 : vector<1x16xf32> to vector<8x16xf32>
    %15 = arith.addf %12, %14 : vector<8x16xf32>
    %c0_12 = arith.constant 0 : index
    %c0_13 = arith.constant 0 : index
    %16 = vector.load %arg6[%c0_12, %c0_13] : memref<8x16xf32, #tpu.memory_space<vmem>>, vector<8x16xf32>
    tpu.vector_store %arg6[%c0_12, %c0_13], %15 {strides = array<i32>} : memref<8x16xf32, #tpu.memory_space<vmem>>, vector<8x16xf32>,
    return
  }
  func.func @transform_0(%arg0: i32) -> (i32, i32) {
    %c0_i32 = arith.constant 0 : i32
    %c0_i32_0 = arith.constant 0 : i32
    return %arg0, %c0_i32 : i32, i32
  }
  func.func @transform_1(%arg0: i32) -> (i32, i32) {
    %c0_i32 = arith.constant 0 : i32
    %c0_i32_0 = arith.constant 0 : i32
    %c0_i32_1 = arith.constant 0 : i32
    return %c0_i32, %c0_i32_0 : i32, i32
  }
  func.func @transform_2(%arg0: i32) -> (i32, i32) {
    %c0_i32 = arith.constant 0 : i32
    %c0_i32_0 = arith.constant 0 : i32
    %c0_i32_1 = arith.constant 0 : i32
    return %c0_i32, %c0_i32_0 : i32, i32
  }
  func.func @transform_3(%arg0: i32) -> (i32, i32) {
    %c0_i32 = arith.constant 0 : i32
    %c0_i32_0 = arith.constant 0 : i32
    %c0_i32_1 = arith.constant 0 : i32
    return %c0_i32, %c0_i32_0 : i32, i32
  }
  func.func @transform_4(%arg0: i32) -> (i32, i32) {
    %c0_i32 = arith.constant 0 : i32
    %c0_i32_0 = arith.constant 0 : i32
    %c0_i32_1 = arith.constant 0 : i32
    return %c0_i32, %c0_i32_0 : i32, i32
  }
  func.func @transform_5(%arg0: i32) -> (i32, i32) {
    %c0_i32 = arith.constant 0 : i32
    %c0_i32_0 = arith.constant 0 : i32
    return %arg0, %c0_i32 : i32, i32
  }
}

</mosaic_0001>

<llo_original>
// kernel: tpu_custom_call.1
$region0: #{tpu_custom_call.1}
  #allocation0 [shape = 'u32[]', space=smem, size = 0x4, offset = 0x4, fixed_abs, tag = 'smem constant byte address 0x4 - core index']
  #allocation1 [shape = 'u32[144,128]{1,0:T(1,128)}', space=vmem, size = 0x12000, scoped, tag = 'internal scratch']
  %s0 = inlined_call_operand.vmem [shape: f32[8,32], index: 0, kind: input, shape index: {}]
  %s1 = inlined_call_operand.vmem [shape: f32[32,128], index: 1, kind: input, shape index: {}]
  %s2 = inlined_call_operand.vmem [shape: f32[1,128], index: 2, kind: input, shape index: {}]
  %s3 = inlined_call_operand.vmem [shape: f32[128,16], index: 3, kind: input, shape index: {}]
  %s4 = inlined_call_operand.vmem [shape: f32[1,16], index: 4, kind: input, shape index: {}]
  %s5 = inlined_call_operand.hbm [shape: f32[8,16], index: 5, kind: output, shape index: {}]
  %s6 = sld [smem:[#allocation0]]
  $region30: #{tpu_custom_call.1} parent=0
    _
  %s8 = ssub.s32 1, %s6
  %s9 = scalar_select 0, %s8, %s6
  $region1: #{tpu_custom_call.1} parent=0
    #allocation2 [shape = 'u8[4096]{0}', space=vmem, size = 0x1000, scoped, tag = 'output window, operand 0, single buffered']
    #allocation3 [shape = 's32[1]{0}', space=sflag, size = 0x4, scoped, tag = 'scoped memory for tpu_custom_call.1']
    %10 = vsyncpa [#allocation3], 0
    // Predicated region
    $region2: #{tpu_custom_call.1} parent=1 // pred_check
      _
    $region3: #{tpu_custom_call.1} parent=1 // pred_check_branch
      %12 = sbr.rel (0) target = $region5
    $region4: #{tpu_custom_call.1} parent=1 // pred_region
      _
    $region5: #{tpu_custom_call.1} parent=1 // pred_fallthru
      _
    // Predicated region
    $region6: #{tpu_custom_call.1} parent=1 // pred_check
      _
    $region7: #{tpu_custom_call.1} parent=1 // pred_check_branch
      %14 = sbr.rel (0) target = $region9
    $region8: #{tpu_custom_call.1} parent=1 // pred_region
      _
    $region9: #{tpu_custom_call.1} parent=1 // pred_fallthru
      _
    // Predicated region
    $region10: #{tpu_custom_call.1} parent=1 // pred_check
      _
    $region11: #{tpu_custom_call.1} parent=1 // pred_check_branch
      %16 = sbr.rel (0) target = $region13
    $region12: #{tpu_custom_call.1} parent=1 // pred_region
      _
    $region13: #{tpu_custom_call.1} parent=1 // pred_fallthru
      _
    // Predicated region
    $region14: #{tpu_custom_call.1} parent=1 // pred_check
      _
    $region15: #{tpu_custom_call.1} parent=1 // pred_check_branch
      %18 = sbr.rel (0) target = $region17
    $region16: #{tpu_custom_call.1} parent=1 // pred_region
      _
    $region17: #{tpu_custom_call.1} parent=1 // pred_fallthru
      _
    // Predicated region
    $region18: #{tpu_custom_call.1} parent=1 // pred_check
      _
    $region19: #{tpu_custom_call.1} parent=1 // pred_check_branch
      %20 = sbr.rel (0) target = $region21
    $region20: #{tpu_custom_call.1} parent=1 // pred_region
      _
    $region21: #{tpu_custom_call.1} parent=1 // pred_fallthru
      _
    %v21 = vld [vmem:[%s0] sm:$0xff]
    %v22 = vld [vmem:[%s1] sm:$0xff]
    %v23 = vld [vmem:[%s1 + $0x8] sm:$0xff]
    %v24 = vld [vmem:[%s1 + $0x10] sm:$0xff]
    %v25 = vld [vmem:[%s1 + $0x18] sm:$0xff]
    %v26 = vld [vmem:[%s2] sm:$0x1]
    %v28 = vlaneseq
    %v29 = vshrl.u32 %v28, 7
    %v30 = vsub.s32 0, %v29
    %v31 = vrot.slane %v26, %v30
    %vm33 = vcmask 261120
    %v35 = vsel %vm33, %v21, 0
    %37 = vmatprep.subr.mxu0 0.0
    %38 = vmatpush1.msra.mxu0 0.0
    %39 = vmatprep.subr.mxu0 0.0
    %40 = vmatpush1.msra.mxu0 0.0
    %41 = vmatprep.subr.mxu0 0.0
    %42 = vmatpush1.msra.mxu0 0.0
    %43 = vmatprep.subr.mxu0 0.0
    %44 = vmatpush1.msra.mxu0 0.0
    %45 = vmatprep.subr.mxu0 0.0
    %46 = vmatpush1.msra.mxu0 0.0
    %47 = vmatprep.subr.mxu0 0.0
    %48 = vmatpush1.msra.mxu0 0.0
    %49 = vmatprep.subr.mxu0 0.0
    %50 = vmatpush1.msra.mxu0 0.0
    %51 = vmatprep.subr.mxu0 0.0
    %52 = vmatpush1.msra.mxu0 0.0
    %53 = vmatprep.subr.mxu0 0.0
    %54 = vmatpush1.msra.mxu0 0.0
    %55 = vmatprep.subr.mxu0 0.0
    %56 = vmatpush1.msra.mxu0 0.0
    %57 = vmatprep.subr.mxu0 0.0
    %58 = vmatpush1.msra.mxu0 0.0
    %59 = vmatprep.subr.mxu0 0.0
    %60 = vmatpush1.msra.mxu0 0.0
    %61 = vmatprep.subr.mxu0 0.0
    %62 = vmatpush1.msra.mxu0 %v25
    %63 = vmatprep.subr.mxu0 0.0
    %64 = vmatpush1.msra.mxu0 %v24
    %65 = vmatprep.subr.mxu0 0.0
    %66 = vmatpush1.msra.mxu0 %v23
    %67 = vmatprep.subr.mxu0 0.0
    %68 = vmatpush1.msra.mxu0 %v22
    %69 = vmatprep.subr.mxu0 0.0
    %70 = vmatpush2.msra.mxu0 0.0
    %71 = vmatprep.subr.mxu0 0.0
    %72 = vmatpush2.msra.mxu0 0.0
    %73 = vmatprep.subr.mxu0 0.0
    %74 = vmatpush2.msra.mxu0 0.0
    %75 = vmatprep.subr.mxu0 0.0
    %76 = vmatpush2.msra.mxu0 0.0
    %77 = vmatprep.subr.mxu0 0.0
    %78 = vmatpush2.msra.mxu0 0.0
    %79 = vmatprep.subr.mxu0 0.0
    %80 = vmatpush2.msra.mxu0 0.0
    %81 = vmatprep.subr.mxu0 0.0
    %82 = vmatpush2.msra.mxu0 0.0
    %83 = vmatprep.subr.mxu0 0.0
    %84 = vmatpush2.msra.mxu0 0.0
    %85 = vmatprep.subr.mxu0 0.0
    %86 = vmatpush2.msra.mxu0 0.0
    %87 = vmatprep.subr.mxu0 0.0
    %88 = vmatpush2.msra.mxu0 0.0
    %89 = vmatprep.subr.mxu0 0.0
    %90 = vmatpush2.msra.mxu0 0.0
    %91 = vmatprep.subr.mxu0 0.0
    %92 = vmatpush2.msra.mxu0 0.0
    %93 = vmatprep.subr.mxu0 0.0
    %94 = vmatpush2.msra.mxu0 0.0
    %95 = vmatprep.subr.mxu0 0.0
    %96 = vmatpush2.msra.mxu0 0.0
    %97 = vmatprep.subr.mxu0 0.0
    %98 = vmatpush2.msra.mxu0 0.0
    %99 = vmatprep.subr.mxu0 0.0
    %100 = vmatpush2.msra.mxu0 0.0
    %101 = vmatprep.mubr.f32.mxu0 0.0
    %102 = vmatmul.mubr.f32.gmra.mxu0 %v35
    %v103 = vpop.f32.mrf.mxu0
    %v104 = vadd.f32 %v31, %v103
    %v105 = vpop.f32.mrf.mxu0
    %106 = vdwg.mxu0
    %vm107 = vcmp.gt.f32.partialorder %v104, 0.0
    %v108 = vmul.f32 %v104, 0.01
    %v109 = vsel %vm107, %v104, %v108
    %v110 = vld [vmem:[%s3] sm:$0xff]
    %v111 = vld [vmem:[%s3 + $0x8] sm:$0xff]
    %v112 = vld [vmem:[%s3 + $0x10] sm:$0xff]
    %v113 = vld [vmem:[%s3 + $0x18] sm:$0xff]
    %v114 = vld [vmem:[%s3 + $0x20] sm:$0xff]
    %v115 = vld [vmem:[%s3 + $0x28] sm:$0xff]
    %v116 = vld [vmem:[%s3 + $0x30] sm:$0xff]
    %v117 = vld [vmem:[%s3 + $0x38] sm:$0xff]
    %v118 = vld [vmem:[%s3 + $0x40] sm:$0xff]
    %v119 = vld [vmem:[%s3 + $0x48] sm:$0xff]
    %v120 = vld [vmem:[%s3 + $0x50] sm:$0xff]
    %v121 = vld [vmem:[%s3 + $0x58] sm:$0xff]
    %v122 = vld [vmem:[%s3 + $0x60] sm:$0xff]
    %v123 = vld [vmem:[%s3 + $0x68] sm:$0xff]
    %v124 = vld [vmem:[%s3 + $0x70] sm:$0xff]
    %v125 = vld [vmem:[%s3 + $0x78] sm:$0xff]
    %v126 = vld [vmem:[%s4] sm:$0x1]
    %v128 = vlaneseq
    %v129 = vshrl.u32 %v128, 7
    %v130 = vsub.s32 0, %v129
    %v131 = vrot.slane %v126, %v130
    %133 = vmatprep.subr.mxu0 0.0
    %134 = vmatpush1.msra.mxu0 %v125
    %135 = vmatprep.subr.mxu0 0.0
    %136 = vmatpush1.msra.mxu0 %v124
    %137 = vmatprep.subr.mxu0 0.0
    %138 = vmatpush1.msra.mxu0 %v123
    %139 = vmatprep.subr.mxu0 0.0
    %140 = vmatpush1.msra.mxu0 %v122
    %141 = vmatprep.subr.mxu0 0.0
    %142 = vmatpush1.msra.mxu0 %v121
    %143 = vmatprep.subr.mxu0 0.0
    %144 = vmatpush1.msra.mxu0 %v120
    %145 = vmatprep.subr.mxu0 0.0
    %146 = vmatpush1.msra.mxu0 %v119
    %147 = vmatprep.subr.mxu0 0.0
    %148 = vmatpush1.msra.mxu0 %v118
    %149 = vmatprep.subr.mxu0 0.0
    %150 = vmatpush1.msra.mxu0 %v117
    %151 = vmatprep.subr.mxu0 0.0
    %152 = vmatpush1.msra.mxu0 %v116
    %153 = vmatprep.subr.mxu0 0.0
    %154 = vmatpush1.msra.mxu0 %v115
    %155 = vmatprep.subr.mxu0 0.0
    %156 = vmatpush1.msra.mxu0 %v114
    %157 = vmatprep.subr.mxu0 0.0
    %158 = vmatpush1.msra.mxu0 %v113
    %159 = vmatprep.subr.mxu0 0.0
    %160 = vmatpush1.msra.mxu0 %v112
    %161 = vmatprep.subr.mxu0 0.0
    %162 = vmatpush1.msra.mxu0 %v111
    %163 = vmatprep.subr.mxu0 0.0
    %164 = vmatpush1.msra.mxu0 %v110
    %165 = vmatprep.subr.mxu0 0.0
    %166 = vmatpush2.msra.mxu0 0.0
    %167 = vmatprep.subr.mxu0 0.0
    %168 = vmatpush2.msra.mxu0 0.0
    %169 = vmatprep.subr.mxu0 0.0
    %170 = vmatpush2.msra.mxu0 0.0
    %171 = vmatprep.subr.mxu0 0.0
    %172 = vmatpush2.msra.mxu0 0.0
    %173 = vmatprep.subr.mxu0 0.0
    %174 = vmatpush2.msra.mxu0 0.0
    %175 = vmatprep.subr.mxu0 0.0
    %176 = vmatpush2.msra.mxu0 0.0
    %177 = vmatprep.subr.mxu0 0.0
    %178 = vmatpush2.msra.mxu0 0.0
    %179 = vmatprep.subr.mxu0 0.0
    %180 = vmatpush2.msra.mxu0 0.0
    %181 = vmatprep.subr.mxu0 0.0
    %182 = vmatpush2.msra.mxu0 0.0
    %183 = vmatprep.subr.mxu0 0.0
    %184 = vmatpush2.msra.mxu0 0.0
    %185 = vmatprep.subr.mxu0 0.0
    %186 = vmatpush2.msra.mxu0 0.0
    %187 = vmatprep.subr.mxu0 0.0
    %188 = vmatpush2.msra.mxu0 0.0
    %189 = vmatprep.subr.mxu0 0.0
    %190 = vmatpush2.msra.mxu0 0.0
    %191 = vmatprep.subr.mxu0 0.0
    %192 = vmatpush2.msra.mxu0 0.0
    %193 = vmatprep.subr.mxu0 0.0
    %194 = vmatpush2.msra.mxu0 0.0
    %195 = vmatprep.subr.mxu0 0.0
    %196 = vmatpush2.msra.mxu0 0.0
    %197 = vmatprep.mubr.f32.mxu0 0.0
    %198 = vmatmul.mubr.f32.gmra.mxu0 %v109
    %v199 = vpop.f32.mrf.mxu0
    %v200 = vadd.f32 %v131, %v199
    %v201 = vpop.f32.mrf.mxu0
    %202 = vdwg.mxu0
    %vm203 = vcmask 130048
    %204 = vst.msk [vmem:[#allocation2] sm:$0xff] %vm203, %v200
    // Predicated region
    $region22: #{tpu_custom_call.1} parent=1 // pred_check
      _
    $region23: #{tpu_custom_call.1} parent=1 // pred_check_branch
      %206 = sbr.rel (0) target = $region25
    $region24: #{tpu_custom_call.1} parent=1 // pred_region
      %s208 = ssub.s32 128, 128
      %209 = vsyncadd [#allocation3], %s208
      %s211 = sshll.u32 [#allocation2], 4
      %s212 = int_to_ptr.vmem [resolvable:$true] %s211
      %214 = dma.vmem_to_hbm [thread:$0]  %s212, 128, %s5, [#allocation3]
    $region25: #{tpu_custom_call.1} parent=1 // pred_fallthru
      _
    // Predicated region
    $region26: #{tpu_custom_call.1} parent=1 // pred_check
      _
    $region27: #{tpu_custom_call.1} parent=1 // pred_check_branch
      %216 = sbr.rel (0) target = $region29
    $region28: #{tpu_custom_call.1} parent=1 // pred_region
      %217 = dma.done [#allocation3], 128
    $region29: #{tpu_custom_call.1} parent=1 // pred_fallthru
      _
    %218 = vsyncpa [#allocation3], 1

</llo_original>
